<compile_context>
chip_gen: v5e
topology: v5e:2x2
jax: 0.10.0
libtpu: 0.0.40
codegen_flags: <defaults>
</compile_context>

<pallas_src>
import numpy as np
import jax
import jax.numpy as jnp
from jax import lax
from jax.experimental import pallas as pl
from jax.experimental.pallas import tpu as pltpu

EPS = 1e-5
MXU_DTYPE = jnp.bfloat16   # MXU operand dtype (accumulation is always f32)
ALIGN = 16                 # sublane alignment of constant-slab slots (bf16 row pairs)


# ----------------------- deterministic parameter init -----------------------
def init_convbn(key, cin, cout, kh, kw):
    k1, k2, k3, k4 = jax.random.split(key, 4)
    return dict(
        w=jax.random.normal(k1, (cout, cin, kh, kw), jnp.float32) * 0.3,
        gamma=1.0 + 0.1 * jax.random.normal(k2, (cout,), jnp.float32),
        beta=0.1 * jax.random.normal(k3, (cout,), jnp.float32),
        mean=0.1 * jax.random.normal(k4, (cout,), jnp.float32),
        var=jnp.ones((cout,), jnp.float32),
    )


def fold_bn(p):
    """Fold eval-mode BatchNorm into conv weight + scalar bias (cout must be 1)."""
    w = np.asarray(p["w"], np.float32)
    assert w.shape[0] == 1, "scalar-bias BN folding assumes exactly 1 output channel"
    gamma = np.asarray(p["gamma"], np.float32)
    beta = np.asarray(p["beta"], np.float32)
    mean = np.asarray(p["mean"], np.float32)
    var = np.asarray(p["var"], np.float32)
    scale = gamma / np.sqrt(var + EPS)
    shift = beta - mean * scale
    return w * scale.reshape(-1, 1, 1, 1), float(shift[0])


# -------------- constant-matrix builders (build-time glue) ------------------
def conv1d_in_matrix(w, in_size, stride, pad):
    """(in_size, out_size) M:  out[:, o] = sum_j in[:, j] * M[j, o]  (conv along last axis)."""
    K = w.shape[0]
    out_size = (in_size + 2 * pad - K) // stride + 1
    M = np.zeros((in_size, out_size), np.float32)
    for o in range(out_size):
        for k in range(K):
            j = stride * o + k - pad
            if 0 <= j < in_size:
                M[j, o] += w[k]
    return M


def conv1d_out_matrix(w, in_size, stride, pad):
    """(out_size, in_size) L:  out[o, :] = sum_j L[o, j] * in[j, :]  (conv along first axis)."""
    return conv1d_in_matrix(w, in_size, stride, pad).T


def interp_matrix(in_size, out_size):
    """F.interpolate(mode='bilinear', align_corners=True) 1-D matrix (out_size, in_size)."""
    R = np.zeros((out_size, in_size), np.float32)
    for i in range(out_size):
        src = 0.0 if out_size == 1 else i * (in_size - 1) / (out_size - 1)
        i0 = min(int(np.floor(src)), in_size - 1)
        i1 = min(i0 + 1, in_size - 1)
        f = src - i0
        R[i, i0] += 1.0 - f
        R[i, i1] += f
    return R


def pack_constants(named, align):
    """Concatenate 2-D constant matrices into one slab; each slot starts at an
    `align`-row boundary.  Returns (slab_f32, {name: (row_off, rows, cols)})."""
    max_c = max(m.shape[1] for m in named.values())
    slots, rows = {}, 0
    for name, m in named.items():
        r, c = m.shape
        slots[name] = (rows, r, c)
        rows += -(-r // align) * align
    slab = np.zeros((rows, max_c), np.float32)
    for name, m in named.items():
        off, r, c = slots[name]
        slab[off:off + r, :c] = m
    return slab, slots


# ------------------------------- Pallas kernel -------------------------------
def build_pfa(params, B, C, H, W):
    w11, b11 = fold_bn(params["conv11"])   # (1, C, 1, 7)
    w12, b12 = fold_bn(params["conv12"])   # (1, 1, 7, 1)
    w21, b21 = fold_bn(params["conv21"])   # (1, 1, 1, 5)
    w22, b22 = fold_bn(params["conv22"])   # (1, 1, 5, 1)
    w31, b31 = fold_bn(params["conv31"])   # (1, 1, 1, 3)
    w32, b32 = fold_bn(params["conv32"])   # (1, 1, 3, 1)

    H1, W1 = (H - 1) // 2 + 1, (W + 2 * 3 - 7) // 2 + 1
    H2, W2 = (H1 - 1) // 2 + 1, (W1 + 2 * 2 - 5) // 2 + 1
    H3, W3 = (H2 - 1) // 2 + 1, (W2 + 2 * 1 - 3) // 2 + 1

    # conv11: per-input-channel (W, W1) matrices stacked with a 16-aligned row
    # stride so the kernel can slice channel c with a dynamic sublane offset.
    Wp = -(-W // ALIGN) * ALIGN
    m11 = np.zeros((C * Wp, W1), np.float32)
    for ci in range(C):
        m11[ci * Wp:ci * Wp + W, :] = conv1d_in_matrix(w11[0, ci, 0, :], W, 2, 3)

    mats = {
        "m11":  m11,                                            # (C*Wp, W1), channel-sliced
        "l12":  conv1d_out_matrix(w12[0, 0, :, 0], H1, 1, 3),   # (H1, H1)
        "m21":  conv1d_in_matrix(w21[0, 0, 0, :], W1, 2, 2),    # (W1, W2)
        "l22":  conv1d_out_matrix(w22[0, 0, :, 0], H2, 1, 2),   # (H2, H2)
        "m31":  conv1d_in_matrix(w31[0, 0, 0, :], W2, 2, 1),    # (W2, W3)
        "l32":  conv1d_out_matrix(w32[0, 0, :, 0], H3, 1, 1),   # (H3, H3)
        "rh32": interp_matrix(H3, H2),                          # (H2, H3)
        "rw32": interp_matrix(W3, W2).T,                        # (W3, W2)
        "rh21": interp_matrix(H2, H1),                          # (H1, H2)
        "rw21": interp_matrix(W2, W1).T,                        # (W2, W1)
        "rh10": interp_matrix(H1, H),                           # (H,  H1)
        "rw10": interp_matrix(W1, W).T,                         # (W1, W)
    }
    cpack_np, slots = pack_constants(mats, ALIGN)
    cpack = jnp.asarray(cpack_np, MXU_DTYPE)   # bf16: half the DMA bytes + VMEM
    m11_off = slots["m11"][0]

    def kernel(x_ref, c_ref, o_ref, y11_sc, t2_sc):
        c = pl.program_id(1)
        last_c = pl.num_programs(1) - 1

        def cst(name):                       # static slice into the resident constant slab
            off, rr, cc = slots[name]
            return c_ref[off:off + rr, :cc]

        def mm(a, b):                        # bf16 MXU operands, f32 accumulation
            return jnp.dot(a.astype(MXU_DTYPE), b.astype(MXU_DTYPE),
                           preferred_element_type=jnp.float32)

        @pl.when(c == 0)
        def _():
            y11_sc[...] = jnp.zeros_like(y11_sc)

        # conv11 (1,7)/2 — this channel's contribution.  The conv's H-stride is
        # a strided VMEM read; channel c's (W, W1) matrix is a dynamic,
        # 16-aligned sublane slice of the constant slab.
        xs = x_ref[pl.ds(0, H1, 2), :]                               # (H1, W)
        row = pl.multiple_of(m11_off + c * Wp, ALIGN)
        y11_sc[...] += mm(xs, c_ref[pl.ds(row, W), :W1])             # (H1, W1) f32 acc

        @pl.when(c == last_c)
        def _():
            y11 = jnp.maximum(y11_sc[...] + b11, 0.0)                # (H1, W1)
            y11_sc[...] = y11            # store back for the strided row read below
            # conv12 (7,1)/1
            y12 = jnp.maximum(mm(cst("l12"), y11) + b12, 0.0)        # (H1, W1)
            # conv21 (1,5)/2 — only on the rows its H-stride keeps
            y11_s = y11_sc[pl.ds(0, H2, 2), :]                       # (H2, W1)
            t2 = jnp.maximum(mm(y11_s, cst("m21")) + b21, 0.0)       # (H2, W2)
            t2_sc[...] = t2
            # conv22 (5,1)/1
            y22 = jnp.maximum(mm(cst("l22"), t2) + b22, 0.0)         # (H2, W2)
            # conv31 (1,3)/2 — only on the rows its H-stride keeps
            t2_s = t2_sc[pl.ds(0, H3, 2), :]                         # (H3, W2)
            t3 = jnp.maximum(mm(t2_s, cst("m31")) + b31, 0.0)        # (H3, W3)
            # conv32 (3,1)/1
            y32 = jnp.maximum(mm(cst("l32"), t3) + b32, 0.0)         # (H3, W3)
            # bilinear (align_corners=True) upsample chain, W (lane) side first
            u = mm(cst("rh32"), mm(y32, cst("rw32"))) + y22          # (H2, W2)
            u = mm(cst("rh21"), mm(u, cst("rw21"))) + y12            # (H1, W1)
            u = mm(cst("rh10"), mm(u, cst("rw10")))                  # (H,  W)
            o_ref[...] = u.astype(o_ref.dtype)

    dot_macs = (C * H1 * W * W1 + H1 * H1 * W1
                + H2 * W1 * W2 + H2 * H2 * W2
                + H3 * W2 * W3 + H3 * H3 * W3
                + H3 * W3 * W2 + H2 * H3 * W2
                + H2 * W2 * W1 + H1 * H2 * W1
                + H1 * W1 * W + H * H1 * W)
    cost = pl.CostEstimate(
        flops=2 * B * dot_macs,
        transcendentals=0,
        bytes_accessed=B * C * H * W * 4
        + int(cpack_np.size) * cpack.dtype.itemsize
        + B * H * W * 4,
    )

    fn = pl.pallas_call(
        kernel,
        out_shape=jax.ShapeDtypeStruct((B, H, W), jnp.float32),
        grid=(B, C),
        in_specs=[
            # one (H, W) image plane per (batch, channel) grid step
            pl.BlockSpec((None, None, H, W), lambda b, c: (b, c, 0, 0)),
            # constant slab: same block every step -> resident in VMEM
            pl.BlockSpec(cpack_np.shape, lambda b, c: (0, 0)),
        ],
        out_specs=pl.BlockSpec((None, H, W), lambda b, c: (b, 0, 0)),
        scratch_shapes=[pltpu.VMEM((H1, W1), jnp.float32),
                        pltpu.VMEM((H2, W2), jnp.float32)],
        compiler_params=pltpu.CompilerParams(
            dimension_semantics=("parallel", "arbitrary"),
            vmem_limit_bytes=32 * 1024 * 1024),
        cost_estimate=cost,
    )

    @jax.jit
    def run(x):
        out = fn(x, cpack)            # (B, H, W)
        return out[:, None, :, :]     # free reshape to (B, 1, H, W)

    return run


# --------------------------- pure-JAX reference ------------------------------
def ref_forward(x, params):
    def cba(x, p, stride, pad):
        y = lax.conv_general_dilated(
            x, p["w"], window_strides=stride,
            padding=[(pad[0], pad[0]), (pad[1], pad[1])],
            dimension_numbers=("NCHW", "OIHW", "NCHW"),
            precision=lax.Precision.HIGHEST)
        scale = p["gamma"] / jnp.sqrt(p["var"] + EPS)
        shift = p["beta"] - p["mean"] * scale
        y = y * scale.reshape(1, -1, 1, 1) + shift.reshape(1, -1, 1, 1)
        return jnp.maximum(y, 0.0)

    def upsample(a, size):
        def interp_axis(a, out_size, axis):
            in_size = a.shape[axis]
            if out_size == 1:
                pos = jnp.zeros((1,), jnp.float32)
            else:
                pos = jnp.arange(out_size, dtype=jnp.float32) * ((in_size - 1) / (out_size - 1))
            i0 = jnp.clip(jnp.floor(pos).astype(jnp.int32), 0, in_size - 1)
            i1 = jnp.minimum(i0 + 1, in_size - 1)
            f = pos - i0.astype(jnp.float32)
            a0 = jnp.take(a, i0, axis=axis)
            a1 = jnp.take(a, i1, axis=axis)
            shp = [1] * a.ndim
            shp[axis] = out_size
            return a0 * (1 - f.reshape(shp)) + a1 * f.reshape(shp)
        a = interp_axis(a, size[0], 2)
        a = interp_axis(a, size[1], 3)
        return a

    size0 = x.shape[2:]
    x = cba(x, params["conv11"], (2, 2), (0, 3))
    size1 = x.shape[2:]
    x1 = cba(x, params["conv12"], (1, 1), (3, 0))
    x = cba(x, params["conv21"], (2, 2), (0, 2))
    size2 = x.shape[2:]
    x2 = cba(x, params["conv22"], (1, 1), (2, 0))
    x = cba(x, params["conv31"], (2, 2), (0, 1))
    x = cba(x, params["conv32"], (1, 1), (1, 0))
    x = upsample(x, size2) + x2
    x = upsample(x, size1) + x1
    x = upsample(x, size0)
    return x


# ------------------------------------ main -----------------------------------
if __name__ == "__main__":
    B, C, H, W = 2, 4, 16, 16
    key = jax.random.PRNGKey(0)
    kx, k11, k12, k21, k22, k31, k32 = jax.random.split(key, 7)
    x = jax.random.normal(kx, (B, C, H, W), jnp.float32)
    params = dict(
        conv11=init_convbn(k11, C, 1, 1, 7),
        conv12=init_convbn(k12, 1, 1, 7, 1),
        conv21=init_convbn(k21, 1, 1, 1, 5),
        conv22=init_convbn(k22, 1, 1, 5, 1),
        conv31=init_convbn(k31, 1, 1, 1, 3),
        conv32=init_convbn(k32, 1, 1, 3, 1),
    )

    run = build_pfa(params, B, C, H, W)
    out = jax.block_until_ready(run(x))
    assert out.shape == (B, 1, H, W) and out.dtype == jnp.float32

    ref = jax.block_until_ready(ref_forward(x, params))
    # bf16 MXU operands (f32 accumulate) vs an f32 HIGHEST-precision reference:
    # accept the looser tolerance the review calls out for the bf16 path.
    tol = 5e-2 if MXU_DTYPE == jnp.bfloat16 else 1e-3
    np.testing.assert_allclose(np.asarray(out), np.asarray(ref), rtol=tol, atol=tol)
    print("KERNEL_OK")
</pallas_src>

<mosaic_0001>
module attributes {stable_mosaic.version = 11 : i64} {
  func.func @kernel(%arg0: i32, %arg1: i32, %arg2: memref<1x1x16x16xf32, #tpu.memory_space<vmem>>, %arg3: memref<240x16xbf16, #tpu.memory_space<vmem>>, %arg4: memref<1x16x16xf32, #tpu.memory_space<vmem>>, %arg5: memref<8x8xf32, #tpu.memory_space<vmem>>, %arg6: memref<4x4xf32, #tpu.memory_space<vmem>>) attributes {dimension_semantics = [#tpu.dimension_semantics<parallel>, #tpu.dimension_semantics<arbitrary>], iteration_bounds = array<i64: 2, 4>, scalar_prefetch = 0 : i64, scratch_operands = 2 : i64, tpu.core_type = #tpu.core_type<tc>, window_params = [{transform_indices = @transform_0, window_bounds = array<i64: 1, 1, 16, 16>}, {pipeline_mode = #tpu.pipeline_mode<synchronous>, transform_indices = @transform_1, window_bounds = array<i64: 240, 16>}, {transform_indices = @transform_2, window_bounds = array<i64: 1, 16, 16>}]} {
    %c0_i32 = arith.constant 0 : i32
    %0 = arith.cmpi eq, %arg1, %c0_i32 : i32
    %1 = arith.extui %0 : i1 to i32
    %c0_i32_0 = arith.constant 0 : i32
    %2 = arith.cmpi ne, %1, %c0_i32_0 : i32
    scf.if %2 {
      %cst_11 = arith.constant 0.000000e+00 : f32
      %18 = vector.broadcast %cst_11 : f32 to vector<8x8xf32>
      %c0_12 = arith.constant 0 : index
      %c0_13 = arith.constant 0 : index
      %19 = vector.load %arg5[%c0_12, %c0_13] : memref<8x8xf32, #tpu.memory_space<vmem>>, vector<8x8xf32>
      tpu.vector_store %arg5[%c0_12, %c0_13], %18 {strides = array<i32>} : memref<8x8xf32, #tpu.memory_space<vmem>>, vector<8x8xf32>,
    } else {
    }
    %c0 = arith.constant 0 : index
    %c0_1 = arith.constant 0 : index
    %c0_2 = arith.constant 0 : index
    %c0_3 = arith.constant 0 : index
    %3 = tpu.strided_load %arg2[%c0, %c0_1, %c0_2, %c0_3] {strides = array<i32: 1, 1, 2, 1>} : memref<1x1x16x16xf32, #tpu.memory_space<vmem>>, vector<1x1x8x16xf32>
    %4 = vector.shape_cast %3 : vector<1x1x8x16xf32> to vector<8x16xf32>
    %c16_i32 = arith.constant 16 : i32
    %5 = arith.muli %arg1, %c16_i32 : i32
    %c0_i32_4 = arith.constant 0 : i32
    %6 = arith.addi %c0_i32_4, %5 : i32
    %7 = tpu.assume_multiple %6, 16 : i32
    %c0_5 = arith.constant 0 : index
    %c0_6 = arith.constant 0 : index
    %8 = vector.load %arg5[%c0_5, %c0_6] : memref<8x8xf32, #tpu.memory_space<vmem>>, vector<8x8xf32>
    %9 = arith.index_cast %7 : i32 to index
    %c0_7 = arith.constant 0 : index
    %10 = vector.load %arg3[%9, %c0_7] : memref<240x16xbf16, #tpu.memory_space<vmem>>, vector<16x8xbf16>
    %11 = arith.truncf %4 : vector<8x16xf32> to vector<8x16xbf16>
    %cst = arith.constant dense<0.000000e+00> : vector<8x8xf32>
    %12 = tpu.matmul %11, %10, %cst {dimension_numbers = #tpu.dot_dimension_numbers<[1], [0], [0], [1], [0, 0, 1, 1], [], []>} : vector<8x16xbf16>, vector<16x8xbf16>, vector<8x8xf32> -> vector<8x8xf32>
    %13 = arith.addf %8, %12 : vector<8x8xf32>
    %c0_8 = arith.constant 0 : index
    %c0_9 = arith.constant 0 : index
    %14 = vector.load %arg5[%c0_8, %c0_9] : memref<8x8xf32, #tpu.memory_space<vmem>>, vector<8x8xf32>
    tpu.vector_store %arg5[%c0_8, %c0_9], %13 {strides = array<i32>} : memref<8x8xf32, #tpu.memory_space<vmem>>, vector<8x8xf32>,
    %c3_i32 = arith.constant 3 : i32
    %15 = arith.cmpi eq, %arg1, %c3_i32 : i32
    %16 = arith.extui %15 : i1 to i32
    %c0_i32_10 = arith.constant 0 : i32
    %17 = arith.cmpi ne, %16, %c0_i32_10 : i32
    scf.if %17 {
      %c0_11 = arith.constant 0 : index
      %c0_12 = arith.constant 0 : index
      %18 = vector.load %arg5[%c0_11, %c0_12] : memref<8x8xf32, #tpu.memory_space<vmem>>, vector<8x8xf32>
      %cst_13 = arith.constant -0.0759383813 : f32
      %19 = vector.broadcast %cst_13 : f32 to vector<8x8xf32>
      %20 = arith.addf %18, %19 : vector<8x8xf32>
      %cst_14 = arith.constant 0.000000e+00 : f32
      %21 = vector.broadcast %cst_14 : f32 to vector<8x8xf32>
      %22 = arith.maximumf %20, %21 : vector<8x8xf32>
      %c0_15 = arith.constant 0 : index
      %c0_16 = arith.constant 0 : index
      %23 = vector.load %arg5[%c0_15, %c0_16] : memref<8x8xf32, #tpu.memory_space<vmem>>, vector<8x8xf32>
      tpu.vector_store %arg5[%c0_15, %c0_16], %22 {strides = array<i32>} : memref<8x8xf32, #tpu.memory_space<vmem>>, vector<8x8xf32>,
      %c64 = arith.constant 64 : index
      %c0_17 = arith.constant 0 : index
      %24 = vector.load %arg3[%c64, %c0_17] : memref<240x16xbf16, #tpu.memory_space<vmem>>, vector<8x8xbf16>
      %25 = arith.truncf %22 : vector<8x8xf32> to vector<8x8xbf16>
      %cst_18 = arith.constant dense<0.000000e+00> : vector<8x8xf32>
      %26 = tpu.matmul %24, %25, %cst_18 {dimension_numbers = #tpu.dot_dimension_numbers<[1], [0], [0], [1], [0, 0, 1, 1], [], []>} : vector<8x8xbf16>, vector<8x8xbf16>, vector<8x8xf32> -> vector<8x8xf32>
      %cst_19 = arith.constant 0.0487448201 : f32
      %27 = vector.broadcast %cst_19 : f32 to vector<8x8xf32>
      %28 = arith.addf %26, %27 : vector<8x8xf32>
      %cst_20 = arith.constant 0.000000e+00 : f32
      %29 = vector.broadcast %cst_20 : f32 to vector<8x8xf32>
      %30 = arith.maximumf %28, %29 : vector<8x8xf32>
      %c0_21 = arith.constant 0 : index
      %c0_22 = arith.constant 0 : index
      %31 = tpu.strided_load %arg5[%c0_21, %c0_22] {strides = array<i32: 2, 1>} : memref<8x8xf32, #tpu.memory_space<vmem>>, vector<4x8xf32>
      %c80 = arith.constant 80 : index
      %c0_23 = arith.constant 0 : index
      %32 = vector.load %arg3[%c80, %c0_23] : memref<240x16xbf16, #tpu.memory_space<vmem>>, vector<8x4xbf16>
      %33 = arith.truncf %31 : vector<4x8xf32> to vector<4x8xbf16>
      %cst_24 = arith.constant dense<0.000000e+00> : vector<4x4xf32>
      %34 = tpu.matmul %33, %32, %cst_24 {dimension_numbers = #tpu.dot_dimension_numbers<[1], [0], [0], [1], [0, 0, 1, 1], [], []>} : vector<4x8xbf16>, vector<8x4xbf16>, vector<4x4xf32> -> vector<4x4xf32>
      %cst_25 = arith.constant 0.0983138158 : f32
      %35 = vector.broadcast %cst_25 : f32 to vector<4x4xf32>
      %36 = arith.addf %34, %35 : vector<4x4xf32>
      %cst_26 = arith.constant 0.000000e+00 : f32
      %37 = vector.broadcast %cst_26 : f32 to vector<4x4xf32>
      %38 = arith.maximumf %36, %37 : vector<4x4xf32>
      %c0_27 = arith.constant 0 : index
      %c0_28 = arith.constant 0 : index
      %39 = vector.load %arg6[%c0_27, %c0_28] : memref<4x4xf32, #tpu.memory_space<vmem>>, vector<4x4xf32>
      tpu.vector_store %arg6[%c0_27, %c0_28], %38 {strides = array<i32>} : memref<4x4xf32, #tpu.memory_space<vmem>>, vector<4x4xf32>,
      %c96 = arith.constant 96 : index
      %c0_29 = arith.constant 0 : index
      %40 = vector.load %arg3[%c96, %c0_29] : memref<240x16xbf16, #tpu.memory_space<vmem>>, vector<4x4xbf16>
      %41 = arith.truncf %38 : vector<4x4xf32> to vector<4x4xbf16>
      %cst_30 = arith.constant dense<0.000000e+00> : vector<4x4xf32>
      %42 = tpu.matmul %40, %41, %cst_30 {dimension_numbers = #tpu.dot_dimension_numbers<[1], [0], [0], [1], [0, 0, 1, 1], [], []>} : vector<4x4xbf16>, vector<4x4xbf16>, vector<4x4xf32> -> vector<4x4xf32>
      %cst_31 = arith.constant 0.199500144 : f32
      %43 = vector.broadcast %cst_31 : f32 to vector<4x4xf32>
      %44 = arith.addf %42, %43 : vector<4x4xf32>
      %cst_32 = arith.constant 0.000000e+00 : f32
      %45 = vector.broadcast %cst_32 : f32 to vector<4x4xf32>
      %46 = arith.maximumf %44, %45 : vector<4x4xf32>
      %c0_33 = arith.constant 0 : index
      %c0_34 = arith.constant 0 : index
      %47 = tpu.strided_load %arg6[%c0_33, %c0_34] {strides = array<i32: 2, 1>} : memref<4x4xf32, #tpu.memory_space<vmem>>, vector<2x4xf32>
      %c112 = arith.constant 112 : index
      %c0_35 = arith.constant 0 : index
      %48 = vector.load %arg3[%c112, %c0_35] : memref<240x16xbf16, #tpu.memory_space<vmem>>, vector<4x2xbf16>
      %49 = arith.truncf %47 : vector<2x4xf32> to vector<2x4xbf16>
      %cst_36 = arith.constant dense<0.000000e+00> : vector<2x2xf32>
      %50 = tpu.matmul %49, %48, %cst_36 {dimension_numbers = #tpu.dot_dimension_numbers<[1], [0], [0], [1], [0, 0, 1, 1], [], []>} : vector<2x4xbf16>, vector<4x2xbf16>, vector<2x2xf32> -> vector<2x2xf32>
      %cst_37 = arith.constant 0.037288323 : f32
      %51 = vector.broadcast %cst_37 : f32 to vector<2x2xf32>
      %52 = arith.addf %50, %51 : vector<2x2xf32>
      %cst_38 = arith.constant 0.000000e+00 : f32
      %53 = vector.broadcast %cst_38 : f32 to vector<2x2xf32>
      %54 = arith.maximumf %52, %53 : vector<2x2xf32>
      %c128 = arith.constant 128 : index
      %c0_39 = arith.constant 0 : index
      %55 = vector.load %arg3[%c128, %c0_39] : memref<240x16xbf16, #tpu.memory_space<vmem>>, vector<2x2xbf16>
      %56 = arith.truncf %54 : vector<2x2xf32> to vector<2x2xbf16>
      %cst_40 = arith.constant dense<0.000000e+00> : vector<2x2xf32>
      %57 = tpu.matmul %55, %56, %cst_40 {dimension_numbers = #tpu.dot_dimension_numbers<[1], [0], [0], [1], [0, 0, 1, 1], [], []>} : vector<2x2xbf16>, vector<2x2xbf16>, vector<2x2xf32> -> vector<2x2xf32>
      %cst_41 = arith.constant -1.483010e-01 : f32
      %58 = vector.broadcast %cst_41 : f32 to vector<2x2xf32>
      %59 = arith.addf %57, %58 : vector<2x2xf32>
      %cst_42 = arith.constant 0.000000e+00 : f32
      %60 = vector.broadcast %cst_42 : f32 to vector<2x2xf32>
      %61 = arith.maximumf %59, %60 : vector<2x2xf32>
      %c144 = arith.constant 144 : index
      %c0_43 = arith.constant 0 : index
      %62 = vector.load %arg3[%c144, %c0_43] : memref<240x16xbf16, #tpu.memory_space<vmem>>, vector<4x2xbf16>
      %c160 = arith.constant 160 : index
      %c0_44 = arith.constant 0 : index
      %63 = vector.load %arg3[%c160, %c0_44] : memref<240x16xbf16, #tpu.memory_space<vmem>>, vector<2x4xbf16>
      %64 = arith.truncf %61 : vector<2x2xf32> to vector<2x2xbf16>
      %cst_45 = arith.constant dense<0.000000e+00> : vector<2x4xf32>
      %65 = tpu.matmul %64, %63, %cst_45 {dimension_numbers = #tpu.dot_dimension_numbers<[1], [0], [0], [1], [0, 0, 1, 1], [], []>} : vector<2x2xbf16>, vector<2x4xbf16>, vector<2x4xf32> -> vector<2x4xf32>
      %66 = arith.truncf %65 : vector<2x4xf32> to vector<2x4xbf16>
      %cst_46 = arith.constant dense<0.000000e+00> : vector<4x4xf32>
      %67 = tpu.matmul %62, %66, %cst_46 {dimension_numbers = #tpu.dot_dimension_numbers<[1], [0], [0], [1], [0, 0, 1, 1], [], []>} : vector<4x2xbf16>, vector<2x4xbf16>, vector<4x4xf32> -> vector<4x4xf32>
      %68 = arith.addf %67, %46 : vector<4x4xf32>
      %c176 = arith.constant 176 : index
      %c0_47 = arith.constant 0 : index
      %69 = vector.load %arg3[%c176, %c0_47] : memref<240x16xbf16, #tpu.memory_space<vmem>>, vector<8x4xbf16>
      %c192 = arith.constant 192 : index
      %c0_48 = arith.constant 0 : index
      %70 = vector.load %arg3[%c192, %c0_48] : memref<240x16xbf16, #tpu.memory_space<vmem>>, vector<4x8xbf16>
      %71 = arith.truncf %68 : vector<4x4xf32> to vector<4x4xbf16>
      %cst_49 = arith.constant dense<0.000000e+00> : vector<4x8xf32>
      %72 = tpu.matmul %71, %70, %cst_49 {dimension_numbers = #tpu.dot_dimension_numbers<[1], [0], [0], [1], [0, 0, 1, 1], [], []>} : vector<4x4xbf16>, vector<4x8xbf16>, vector<4x8xf32> -> vector<4x8xf32>
      %73 = arith.truncf %72 : vector<4x8xf32> to vector<4x8xbf16>
      %cst_50 = arith.constant dense<0.000000e+00> : vector<8x8xf32>
      %74 = tpu.matmul %69, %73, %cst_50 {dimension_numbers = #tpu.dot_dimension_numbers<[1], [0], [0], [1], [0, 0, 1, 1], [], []>} : vector<8x4xbf16>, vector<4x8xbf16>, vector<8x8xf32> -> vector<8x8xf32>
      %75 = arith.addf %74, %30 : vector<8x8xf32>
      %c208 = arith.constant 208 : index
      %c0_51 = arith.constant 0 : index
      %76 = vector.load %arg3[%c208, %c0_51] : memref<240x16xbf16, #tpu.memory_space<vmem>>, vector<16x8xbf16>
      %c224 = arith.constant 224 : index
      %c0_52 = arith.constant 0 : index
      %77 = vector.load %arg3[%c224, %c0_52] : memref<240x16xbf16, #tpu.memory_space<vmem>>, vector<8x16xbf16>
      %78 = arith.truncf %75 : vector<8x8xf32> to vector<8x8xbf16>
      %cst_53 = arith.constant dense<0.000000e+00> : vector<8x16xf32>
      %79 = tpu.matmul %78, %77, %cst_53 {dimension_numbers = #tpu.dot_dimension_numbers<[1], [0], [0], [1], [0, 0, 1, 1], [], []>} : vector<8x8xbf16>, vector<8x16xbf16>, vector<8x16xf32> -> vector<8x16xf32>
      %80 = arith.truncf %79 : vector<8x16xf32> to vector<8x16xbf16>
      %cst_54 = arith.constant dense<0.000000e+00> : vector<16x16xf32>
      %81 = tpu.matmul %76, %80, %cst_54 {dimension_numbers = #tpu.dot_dimension_numbers<[1], [0], [0], [1], [0, 0, 1, 1], [], []>} : vector<16x8xbf16>, vector<8x16xbf16>, vector<16x16xf32> -> vector<16x16xf32>
      %c0_55 = arith.constant 0 : index
      %c0_56 = arith.constant 0 : index
      %c0_57 = arith.constant 0 : index
      %82 = vector.load %arg4[%c0_55, %c0_56, %c0_57] : memref<1x16x16xf32, #tpu.memory_space<vmem>>, vector<1x16x16xf32>
      %83 = vector.shape_cast %82 : vector<1x16x16xf32> to vector<16x16xf32>
      %84 = vector.shape_cast %81 : vector<16x16xf32> to vector<1x16x16xf32>
      tpu.vector_store %arg4[%c0_55, %c0_56, %c0_57], %84 {strides = array<i32>} : memref<1x16x16xf32, #tpu.memory_space<vmem>>, vector<1x16x16xf32>,
    } else {
    }
    return
  }
  func.func @transform_0(%arg0: i32, %arg1: i32) -> (i32, i32, i32, i32) {
    %c0_i32 = arith.constant 0 : i32
    %c0_i32_0 = arith.constant 0 : i32
    %c0_i32_1 = arith.constant 0 : i32
    return %arg0, %arg1, %c0_i32, %c0_i32_0 : i32, i32, i32, i32
  }
  func.func @transform_1(%arg0: i32, %arg1: i32) -> (i32, i32) {
    %c0_i32 = arith.constant 0 : i32
    %c0_i32_0 = arith.constant 0 : i32
    %c0_i32_1 = arith.constant 0 : i32
    return %c0_i32, %c0_i32_0 : i32, i32
  }
  func.func @transform_2(%arg0: i32, %arg1: i32) -> (i32, i32, i32) {
    %c0_i32 = arith.constant 0 : i32
    %c0_i32_0 = arith.constant 0 : i32
    %c0_i32_1 = arith.constant 0 : i32
    return %arg0, %c0_i32, %c0_i32_0 : i32, i32, i32
  }
}

</mosaic_0001>

<llo_original>
// kernel: run.1
$region0: #{run.1}
  #allocation0 [shape = 'u32[]', space=smem, size = 0x4, offset = 0x4, fixed_abs, tag = 'smem constant byte address 0x4 - core index']
  #allocation1 [shape = 'u32[72,128]{1,0:T(1,128)}', space=vmem, size = 0x9000, scoped, tag = 'internal scratch']
  #allocation2 [shape = 'f32[8,8]{1,0:T(8,128)}', space=vmem, size = 0x1000, scoped, tag = 'scratch operand']
  #allocation3 [shape = 'f32[4,4]{1,0:T(4,128)}', space=vmem, size = 0x800, scoped, tag = 'scratch operand']
  %s0 = inlined_call_operand.hbm [shape: f32[2,4,16,16], index: 0, kind: input, shape index: {}]
  %s1 = inlined_call_operand.hbm [shape: bf16[240,16], index: 1, kind: input, shape index: {}]
  %s2 = inlined_call_operand.hbm [shape: f32[2,16,16], index: 2, kind: output, shape index: {}]
  %s3 = sld [smem:[#allocation0]]
  $region57: #{run.1} parent=0
    _
  %s5 = ssub.s32 1, %s3
  %s6 = scalar_select 0, %s5, %s3
  $region1: #{run.1} parent=0
    #allocation4 [shape = 'u8[16384]{0}', space=vmem, size = 0x4000, scoped, tag = 'input window, operand 0']
    #allocation5 [shape = 's32[2]{0}', space=sflag, size = 0x8, scoped, tag = 'scoped memory for run.1']
    #allocation6 [shape = 's32[2]{0}', space=sflag, size = 0x8, scoped, tag = 'scoped memory for run.1']
    #allocation7 [shape = 'u8[61440]{0}', space=vmem, size = 0xf000, scoped, tag = 'input window, operand 1, single buffered']
    #allocation8 [shape = 's32[1]{0}', space=sflag, size = 0x4, scoped, tag = 'scoped memory for run.1']
    #allocation9 [shape = 'u8[16384]{0}', space=vmem, size = 0x4000, scoped, tag = 'output window, operand 0']
    %7 = vsyncpa [#allocation5], 0
    %s8 = scalar_lea.sflag [#allocation5], 1
    %9 = vsyncpa %s8, 0
    %10 = vsyncpa [#allocation8], 0
    %11 = vsyncpa [#allocation6], 0
    %s12 = scalar_lea.sflag [#allocation6], 1
    %13 = vsyncpa %s12, 0
    loop: start=0, step=1, limit=10
    $region2: #{run.1} parent=1 // loop_pre_header
      _
    $region3: #{run.1} parent=1 // loop_header
      %s15 = sphi 0, %s19
      %p16 = scmp.ge.s32.totalorder %s15, 10
      %s22 = sphi 0, %s34
      %s23 = sphi 0, %s30
      %s24 = sphi 0, %s22
      %s25 = sphi 0, %s23
      %s26 = sphi 0, %s24
      %s27 = sphi 0, %s25
      %s39 = sphi 0, %s41
      %s42 = sphi 0, %s39
      %s43 = sphi 0, %s42
      %s59 = sphi 0, %s43
      %s63 = sphi 0, %s63
      %s65 = sphi 0, %s63
      %s66 = sphi 0, %s65
      %s80 = sphi 0, %s66
      %s86 = sphi 0, %s88
      %s89 = sphi 0, %s86
      %s90 = sphi 0, %s89
      %s106 = sphi 0, %s90
    $region4: #{run.1} parent=1 // loop_header_branch
      %18 = sbr.rel (%p16) target = $region8
    $region5: #{run.1} parent=1 // loop_body
      %s20 = ssub.s32 %s15, 1
      %s21 = ssub.s32 %s15, 2
      %s28 = sadd.s32 1, %s23
      %p29 = scmp.ge.s32.totalorder %s28, 4
      %s30 = scalar_select %p29, 0, %s28
      %s31 = sadd.s32 1, %s22
      %s32 = scalar_select %p29, %s31, %s22
      %p33 = scmp.ge.s32.totalorder %s32, 2
      %s34 = scalar_select %p33, 0, %s32
      %s35 = ssub.s32 %s22, %s34
      %s36 = ssub.s32 %s23, %s30
      %s37 = sor.u32 %s35, %s36
      %p38 = scmp.eq.s32.totalorder %s37, 0
      %s40 = sadd.s32 %s39, 1
      %s41 = scalar_select %p38, %s39, %s40
      %p44 = pneg %p38
      %p45 = scmp.eq.s32.totalorder %s15, 7
      %p46 = por %p44, %p45
      %p47 = scmp.ne.s32.totalorder %s39, %s42
      %p48 = scmp.eq.s32.totalorder %s15, 0
      %p49 = por %p47, %p48
      %p50 = scmp.ne.s32.totalorder %s39, %s42
      %p51 = scmp.eq.s32.totalorder %s20, 7
      %p52 = por %p50, %p51
      %p53 = scmp.ne.s32.totalorder %s42, %s43
      %p54 = scmp.eq.s32.totalorder %s20, 0
      %p55 = por %p53, %p54
      %p56 = scmp.ne.s32.totalorder %s42, %s43
      %p57 = scmp.eq.s32.totalorder %s21, 7
      %p58 = por %p56, %p57
      %p60 = scmp.ne.s32.totalorder %s43, %s59
      %p61 = scmp.eq.s32.totalorder %s21, 0
      %p62 = por %p60, %p61
      %s64 = sadd.s32 %s63, 1
      %p67 = scmp.eq.s32.totalorder %s15, 7
      %p68 = scmp.ne.s32.totalorder %s63, %s65
      %p69 = scmp.eq.s32.totalorder %s15, 0
      %p70 = por %p68, %p69
      %p71 = scmp.ne.s32.totalorder %s63, %s65
      %p72 = scmp.eq.s32.totalorder %s20, 7
      %p73 = por %p71, %p72
      %p74 = scmp.ne.s32.totalorder %s65, %s66
      %p75 = scmp.eq.s32.totalorder %s20, 0
      %p76 = por %p74, %p75
      %p77 = scmp.ne.s32.totalorder %s65, %s66
      %p78 = scmp.eq.s32.totalorder %s21, 7
      %p79 = por %p77, %p78
      %p81 = scmp.ne.s32.totalorder %s66, %s80
      %p82 = scmp.eq.s32.totalorder %s21, 0
      %p83 = por %p81, %p82
      %s84 = ssub.s32 %s22, %s34
      %p85 = scmp.eq.s32.totalorder %s84, 0
      %s87 = sadd.s32 %s86, 1
      %s88 = scalar_select %p85, %s86, %s87
      %p91 = pneg %p85
      %p92 = scmp.eq.s32.totalorder %s15, 7
      %p93 = por %p91, %p92
      %p94 = scmp.ne.s32.totalorder %s86, %s89
      %p95 = scmp.eq.s32.totalorder %s15, 0
      %p96 = por %p94, %p95
      %p97 = scmp.ne.s32.totalorder %s86, %s89
      %p98 = scmp.eq.s32.totalorder %s20, 7
      %p99 = por %p97, %p98
      %p100 = scmp.ne.s32.totalorder %s89, %s90
      %p101 = scmp.eq.s32.totalorder %s20, 0
      %p102 = por %p100, %p101
      %p103 = scmp.ne.s32.totalorder %s89, %s90
      %p104 = scmp.eq.s32.totalorder %s21, 7
      %p105 = por %p103, %p104
      %p107 = scmp.ne.s32.totalorder %s90, %s106
      %p108 = scmp.eq.s32.totalorder %s21, 0
      %p109 = por %p107, %p108
      %p110 = scmp.le.s32.totalorder 1, %s15
      %p111 = scmp.lt.s32.totalorder %s15, 9
      %p112 = pnand %p110, %p111
      %p113 = pneg %p112
      // Predicated region
      $region9: #{run.1} parent=5 // pred_check
        _
      $region10: #{run.1} parent=5 // pred_check_branch
        %115 = sbr.rel (%p112) target = $region12
      $region11: #{run.1} parent=5 // pred_region
        %s116 = ssub.s32 %s15, 1
        // Predicated region
        $region13: #{run.1} parent=11 // pred_check
          %p117 = pneg %p76
        $region14: #{run.1} parent=11 // pred_check_branch
          %119 = sbr.rel (%p117) target = $region16
        $region15: #{run.1} parent=11 // pred_region
          %121 = vsyncadd [#allocation8], 0
          %s122 = sshll.u32 %s1, 4
          %s123 = int_to_ptr.hbm [resolvable:$true] %s122
          %s124 = sshll.u32 [#allocation7], 4
          %s125 = int_to_ptr.vmem [resolvable:$true] %s124
          %130 = dma.hbm_to_vmem [thread:$0]  %s123, 1920, %s125, [#allocation8], 64, 64, 4
        $region16: #{run.1} parent=11 // pred_fallthru
          _
      $region12: #{run.1} parent=5 // pred_fallthru
        _
      %p131 = scmp.lt.s32.totalorder %s15, 8
      // Predicated region
      $region17: #{run.1} parent=5 // pred_check
        %p132 = pneg %p131
      $region18: #{run.1} parent=5 // pred_check_branch
        %134 = sbr.rel (%p132) target = $region20
      $region19: #{run.1} parent=5 // pred_region
        // Predicated region
        $region21: #{run.1} parent=19 // pred_check
          %p135 = pneg %p49
        $region22: #{run.1} parent=19 // pred_check_branch
          %137 = sbr.rel (%p135) target = $region24
        $region23: #{run.1} parent=19 // pred_region
          %s138 = sand.u32 %s39, 1
          %s139 = scalar_lea.sflag [#allocation5], %s138
          %s140 = sand.u32 %s39, 1
          %s141 = smul.addr %s140, 16
          %s142 = scalar_lea.vmem [#allocation4], %s141
          %144 = vsyncadd %s139, 0
          %s145 = smul.addr %s23, 2
          %s146 = smul.addr %s22, 8
          %s147 = sadd.s32 %s145, %s146
          %s148 = smul.addr %s147, 8
          %s149 = scalar_lea.hbm %s0, %s148
          %s150 = sshll.u32 %s149, 4
          %s151 = int_to_ptr.hbm [resolvable:$true] %s150
          %s152 = sshll.u32 %s142, 4
          %s153 = int_to_ptr.vmem [resolvable:$true] %s152
          %158 = dma.hbm_to_vmem [thread:$0]  %s151, 256, %s153, %s139, 128, 128, 8
        $region24: #{run.1} parent=19 // pred_fallthru
          _
      $region20: #{run.1} parent=5 // pred_fallthru
        _
      %p159 = scmp.le.s32.totalorder 1, %s15
      %p160 = scmp.lt.s32.totalorder %s15, 9
      %p161 = pnand %p159, %p160
      %p162 = pneg %p161
      // Predicated region
      $region25: #{run.1} parent=5 // pred_check
        _
      $region26: #{run.1} parent=5 // pred_check_branch
        %164 = sbr.rel (%p161) target = $region28
      $region27: #{run.1} parent=5 // pred_region
        %s165 = ssub.s32 %s15, 1
        %s166 = sand.u32 %s42, 1
        %s167 = scalar_lea.sflag [#allocation5], %s166
        %s168 = sand.u32 %s42, 1
        %s169 = smul.addr %s168, 16
        %s170 = scalar_lea.vmem [#allocation4], %s169
        // Predicated region
        $region29: #{run.1} parent=27 // pred_check
          %p171 = pneg %p55
        $region30: #{run.1} parent=27 // pred_check_branch
          %173 = sbr.rel (%p171) target = $region32
        $region31: #{run.1} parent=27 // pred_region
          %175 = dma.done %s167, 256
        $region32: #{run.1} parent=27 // pred_fallthru
          _
        // Predicated region
        $region33: #{run.1} parent=27 // pred_check
          %p176 = pneg %p76
        $region34: #{run.1} parent=27 // pred_check_branch
          %178 = sbr.rel (%p176) target = $region36
        $region35: #{run.1} parent=27 // pred_region
          %180 = dma.done [#allocation8], 1920
        $region36: #{run.1} parent=27 // pred_fallthru
          _
        %s181 = sand.u32 %s42, 1
        %s182 = scalar_lea.sflag [#allocation5], %s181
        %s183 = sand.u32 %s42, 1
        %s184 = smul.addr %s183, 16
        %s185 = scalar_lea.vmem [#allocation4], %s184
        %p186 = pneg %p55
        %p187 = pneg %p52
        %p188 = pneg %p76
        %p189 = pneg %p73
        %p190 = pneg %p102
        %p191 = pneg %p99
        %s192 = sand.u32 %s89, 1
        %s193 = scalar_lea.sflag [#allocation6], %s192
        %s194 = sand.u32 %s89, 1
        %s195 = smul.addr %s194, 16
        %s196 = scalar_lea.vmem [#allocation9], %s195
        %p198 = scmp.eq.s32.totalorder %s25, 0
        // Predicated region
        $region37: #{run.1} parent=27 // pred_check
          %p199 = pneg %p198
        $region38: #{run.1} parent=27 // pred_check_branch
          %201 = sbr.rel (%p199) target = $region40
        $region39: #{run.1} parent=27 // pred_region
          %vm202 = vcmask 64512
          %203 = vst.msk [vmem:[#allocation2] sm:$0xff] %vm202, 0.0
        $region40: #{run.1} parent=27 // pred_fallthru
          _
        %v204 = vld [vmem:[%s170] ss:$2 sm:$0xff]
        %s205 = smul.u32 %s25, 16
        %v206 = vld [vmem:[#allocation2] sm:$0xff]
        %s207 = sshra.s32 %s205, 3
        %s208 = sand.u32 %s205, 7
        %s209 = smul.addr %s207, 4
        %s210 = scalar_lea.vmem [#allocation7], %s209
        %v211 = vld [vmem:[%s210] sm:$0xf]
        %v212 = vld [vmem:[%s210 + $0x4] sm:$0xf]
        %v213 = vpack.c.bf16 %v204, %v204
        %v216 = vunpack.c.l.b16 %v211
        %v217 = vunpack.c.l.b16 %v212
        %v218 = vpack.c.b16 %v217, %v216
        %vm220 = vcmask 130048
        %v222 = vsel %vm220, %v213, 0
        %224 = vmatpush.bf16.msra.mxu0 0
        %225 = vmatpush.bf16.msra.mxu0 0
        %226 = vmatpush.bf16.msra.mxu0 0
        %227 = vmatpush.bf16.msra.mxu0 0
        %228 = vmatpush.bf16.msra.mxu0 0
        %229 = vmatpush.bf16.msra.mxu0 0
        %230 = vmatpush.bf16.msra.mxu0 0
        %231 = vmatpush.bf16.msra.mxu0 %v218
        %232 = vmatmul.bf16.gmra.mxu0 %v222
        %v233 = vpop.f32.mrf.mxu0
        %v234 = vadd.f32 0.0, %v233
        %v235 = vpop.f32.mrf.mxu0
        %236 = vdwg.mxu0
        %v237 = vadd.f32 %v206, %v234
        %vm238 = vcmask 64512
        %239 = vst.msk [vmem:[#allocation2] sm:$0xff] %vm238, %v237
        %p240 = scmp.eq.s32.totalorder %s25, 3
        // Predicated region
        $region41: #{run.1} parent=27 // pred_check
          %p241 = pneg %p240
        $region42: #{run.1} parent=27 // pred_check_branch
          %243 = sbr.rel (%p241) target = $region44
        $region43: #{run.1} parent=27 // pred_region
          %v244 = vld [vmem:[#allocation2] sm:$0xff]
          %v245 = vadd.f32 %v244, -0.07593838
          %v246 = vmax.f32 %v245, 0.0
          %247 = vst.msk [vmem:[#allocation2] sm:$0xff] %vm238, %v246
          %v248 = vld [vmem:[#allocation7 + $0x20] sm:$0xf]
          %v249 = vpack.c.bf16 %v246, %v246
          %v251 = vsel %vm238, %v248, 0
          %vm253 = vcmask 1043456
          %v255 = vsel %vm253, %v249, 0
          %257 = vmatpush.bf16.msra.mxu0 0
          %258 = vmatpush.bf16.msra.mxu0 0
          %259 = vmatpush.bf16.msra.mxu0 0
          %260 = vmatpush.bf16.msra.mxu0 0
          %261 = vmatpush.bf16.msra.mxu0 0
          %262 = vmatpush.bf16.msra.mxu0 0
          %263 = vmatpush.bf16.msra.mxu0 0
          %264 = vmatpush.bf16.msra.mxu0 %v255
          %265 = vmatmul.bf16.gmra.mxu0 %v251
          %v266 = vpop.f32.mrf.mxu0
          %v267 = vadd.f32 0.04874482, %v266
          %v268 = vpop.f32.mrf.mxu0
          %269 = vdwg.mxu0
          %v270 = vmax.f32 %v267, 0.0
          %v271 = vld [vmem:[#allocation2] ss:$2 sm:$0xf]
          %v272 = vld [vmem:[#allocation7 + $0x28] sm:$0xf]
          %v273 = vpack.c.bf16 %v271, %v271
          %v275 = vsel %vm238, %v273, 0
          %v278 = vsel %vm253, %v272, 0
          %280 = vmatpush.bf16.msra.mxu0 0
          %281 = vmatpush.bf16.msra.mxu0 0
          %282 = vmatpush.bf16.msra.mxu0 0
          %283 = vmatpush.bf16.msra.mxu0 0
          %284 = vmatpush.bf16.msra.mxu0 0
          %285 = vmatpush.bf16.msra.mxu0 0
          %286 = vmatpush.bf16.msra.mxu0 0
          %287 = vmatpush.bf16.msra.mxu0 %v278
          %288 = vmatmul.bf16.gmra.mxu0 %v275
          %v289 = vpop.f32.mrf.mxu0
          %v290 = vadd.f32 0.098313816, %v289
          %v291 = vpop.f32.mrf.mxu0
          %292 = vdwg.mxu0
          %v293 = vmax.f32 %v290, 0.0
          %vm294 = vcmask 27648
          %295 = vst.msk [vmem:[#allocation3] sm:$0xf] %vm294, %v293
          %v296 = vld [vmem:[#allocation7 + $0x30] sm:$0x3]
          %v297 = vpack.c.bf16 %v293, %v293
          %vm298 = vcmask 31744
          %v300 = vsel %vm298, %v296, 0
          %vm302 = vcmask 1041408
          %v304 = vsel %vm302, %v297, 0
          %306 = vmatpush.bf16.msra.mxu0 0
          %307 = vmatpush.bf16.msra.mxu0 0
          %308 = vmatpush.bf16.msra.mxu0 0
          %309 = vmatpush.bf16.msra.mxu0 0
          %310 = vmatpush.bf16.msra.mxu0 0
          %311 = vmatpush.bf16.msra.mxu0 0
          %312 = vmatpush.bf16.msra.mxu0 0
          %313 = vmatpush.bf16.msra.mxu0 %v304
          %314 = vmatmul.bf16.gmra.mxu0 %v300
          %v315 = vpop.f32.mrf.mxu0
          %v316 = vadd.f32 0.19950014, %v315
          %v317 = vpop.f32.mrf.mxu0
          %318 = vdwg.mxu0
          %v319 = vmax.f32 %v316, 0.0
          %v320 = vld [vmem:[#allocation3] ss:$2 sm:$0x3]
          %v321 = vld [vmem:[#allocation7 + $0x38] sm:$0x3]
          %v322 = vpack.c.bf16 %v320, %v320
          %v324 = vsel %vm298, %v322, 0
          %v327 = vsel %vm302, %v321, 0
          %329 = vmatpush.bf16.msra.mxu0 0
          %330 = vmatpush.bf16.msra.mxu0 0
          %331 = vmatpush.bf16.msra.mxu0 0
          %332 = vmatpush.bf16.msra.mxu0 0
          %333 = vmatpush.bf16.msra.mxu0 0
          %334 = vmatpush.bf16.msra.mxu0 0
          %335 = vmatpush.bf16.msra.mxu0 0
          %336 = vmatpush.bf16.msra.mxu0 %v327
          %337 = vmatmul.bf16.gmra.mxu0 %v324
          %v338 = vpop.f32.mrf.mxu0
          %v339 = vadd.f32 0.037288323, %v338
          %v340 = vpop.f32.mrf.mxu0
          %341 = vdwg.mxu0
          %v342 = vmax.f32 %v339, 0.0
          %v343 = vld [vmem:[#allocation7 + $0x40] sm:$0x1]
          %v344 = vpack.c.bf16 %v342, %v342
          %vm345 = vcmask 15360
          %v347 = vsel %vm345, %v343, 0
          %vm349 = vcmask 1040384
          %v351 = vsel %vm349, %v344, 0
          %353 = vmatpush.bf16.msra.mxu0 0
          %354 = vmatpush.bf16.msra.mxu0 0
          %355 = vmatpush.bf16.msra.mxu0 0
          %356 = vmatpush.bf16.msra.mxu0 0
          %357 = vmatpush.bf16.msra.mxu0 0
          %358 = vmatpush.bf16.msra.mxu0 0
          %359 = vmatpush.bf16.msra.mxu0 0
          %360 = vmatpush.bf16.msra.mxu0 %v351
          %361 = vmatmul.bf16.gmra.mxu0 %v347
          %v362 = vpop.f32.mrf.mxu0
          %v363 = vadd.f32 -0.148301, %v362
          %v364 = vpop.f32.mrf.mxu0
          %365 = vdwg.mxu0
          %v366 = vmax.f32 %v363, 0.0
          %v367 = vld [vmem:[#allocation7 + $0x48] sm:$0x3]
          %v368 = vld [vmem:[#allocation7 + $0x50] sm:$0x1]
          %v369 = vpack.c.bf16 %v366, %v366
          %v371 = vsel %vm345, %v369, 0
          %v374 = vsel %vm349, %v368, 0
          %376 = vmatpush.bf16.msra.mxu0 0
          %377 = vmatpush.bf16.msra.mxu0 0
          %378 = vmatpush.bf16.msra.mxu0 0
          %379 = vmatpush.bf16.msra.mxu0 0
          %380 = vmatpush.bf16.msra.mxu0 0
          %381 = vmatpush.bf16.msra.mxu0 0
          %382 = vmatpush.bf16.msra.mxu0 0
          %383 = vmatpush.bf16.msra.mxu0 %v374
          %384 = vmatmul.bf16.gmra.mxu0 %v371
          %v385 = vpop.f32.mrf.mxu0
          %v386 = vadd.f32 0.0, %v385
          %v387 = vpop.f32.mrf.mxu0
          %388 = vdwg.mxu0
          %v389 = vpack.c.bf16 %v386, %v386
          %v391 = vsel %vm345, %v367, 0
          %v394 = vsel %vm349, %v389, 0
          %396 = vmatpush.bf16.msra.mxu0 0
          %397 = vmatpush.bf16.msra.mxu0 0
          %398 = vmatpush.bf16.msra.mxu0 0
          %399 = vmatpush.bf16.msra.mxu0 0
          %400 = vmatpush.bf16.msra.mxu0 0
          %401 = vmatpush.bf16.msra.mxu0 0
          %402 = vmatpush.bf16.msra.mxu0 0
          %403 = vmatpush.bf16.msra.mxu0 %v394
          %404 = vmatmul.bf16.gmra.mxu0 %v391
          %v405 = vpop.f32.mrf.mxu0
          %v406 = vadd.f32 %v319, %v405
          %v407 = vpop.f32.mrf.mxu0
          %408 = vdwg.mxu0
          %v409 = vld [vmem:[#allocation7 + $0x58] sm:$0xf]
          %v410 = vld [vmem:[#allocation7 + $0x60] sm:$0x3]
          %v411 = vpack.c.bf16 %v406, %v406
          %v413 = vsel %vm298, %v411, 0
          %v416 = vsel %vm302, %v410, 0
          %418 = vmatpush.bf16.msra.mxu0 0
          %419 = vmatpush.bf16.msra.mxu0 0
          %420 = vmatpush.bf16.msra.mxu0 0
          %421 = vmatpush.bf16.msra.mxu0 0
          %422 = vmatpush.bf16.msra.mxu0 0
          %423 = vmatpush.bf16.msra.mxu0 0
          %424 = vmatpush.bf16.msra.mxu0 0
          %425 = vmatpush.bf16.msra.mxu0 %v416
          %426 = vmatmul.bf16.gmra.mxu0 %v413
          %v427 = vpop.f32.mrf.mxu0
          %v428 = vadd.f32 0.0, %v427
          %v429 = vpop.f32.mrf.mxu0
          %430 = vdwg.mxu0
          %v431 = vpack.c.bf16 %v428, %v428
          %v433 = vsel %vm298, %v409, 0
          %v436 = vsel %vm302, %v431, 0
          %438 = vmatpush.bf16.msra.mxu0 0
          %439 = vmatpush.bf16.msra.mxu0 0
          %440 = vmatpush.bf16.msra.mxu0 0
          %441 = vmatpush.bf16.msra.mxu0 0
          %442 = vmatpush.bf16.msra.mxu0 0
          %443 = vmatpush.bf16.msra.mxu0 0
          %444 = vmatpush.bf16.msra.mxu0 0
          %445 = vmatpush.bf16.msra.mxu0 %v436
          %446 = vmatmul.bf16.gmra.mxu0 %v433
          %v447 = vpop.f32.mrf.mxu0
          %v448 = vadd.f32 %v270, %v447
          %v449 = vpop.f32.mrf.mxu0
          %450 = vdwg.mxu0
          %v451 = vld [vmem:[#allocation7 + $0x68] sm:$0xf]
          %v452 = vld [vmem:[#allocation7 + $0x6c] sm:$0xf]
          %v453 = vld [vmem:[#allocation7 + $0x70] sm:$0xf]
          %v454 = vpack.c.bf16 %v448, %v448
          %v456 = vsel %vm238, %v454, 0
          %v459 = vsel %vm253, %v453, 0
          %461 = vmatpush.bf16.msra.mxu0 0
          %462 = vmatpush.bf16.msra.mxu0 0
          %463 = vmatpush.bf16.msra.mxu0 0
          %464 = vmatpush.bf16.msra.mxu0 0
          %465 = vmatpush.bf16.msra.mxu0 0
          %466 = vmatpush.bf16.msra.mxu0 0
          %467 = vmatpush.bf16.msra.mxu0 0
          %468 = vmatpush.bf16.msra.mxu0 %v459
          %469 = vmatmul.bf16.gmra.mxu0 %v456
          %v470 = vpop.f32.mrf.mxu0
          %v471 = vadd.f32 0.0, %v470
          %v472 = vpop.f32.mrf.mxu0
          %473 = vdwg.mxu0
          %v474 = vpack.c.bf16 %v471, %v471
          %v477 = vunpack.c.l.b16 %v451
          %v478 = vunpack.c.l.b16 %v452
          %v479 = vpack.c.b16 %v478, %v477
          %v481 = vsel %vm238, %v479, 0
          %v484 = vsel %vm253, %v474, 0
          %486 = vmatpush.bf16.msra.mxu0 0
          %487 = vmatpush.bf16.msra.mxu0 0
          %488 = vmatpush.bf16.msra.mxu0 0
          %489 = vmatpush.bf16.msra.mxu0 0
          %490 = vmatpush.bf16.msra.mxu0 0
          %491 = vmatpush.bf16.msra.mxu0 0
          %492 = vmatpush.bf16.msra.mxu0 0
          %493 = vmatpush.bf16.msra.mxu0 %v484
          %494 = vmatmul.bf16.gmra.mxu0 %v481
          %v495 = vpop.f32.mrf.mxu0
          %v496 = vadd.f32 0.0, %v495
          %v497 = vpop.f32.mrf.mxu0
          %v498 = vadd.f32 0.0, %v497
          %499 = vdwg.mxu0
          %500 = vst.msk [vmem:[%s196] sm:$0xff] %vm220, %v496
          %501 = vst.msk [vmem:[%s196 + $0x8] sm:$0xff] %vm220, %v498
        $region44: #{run.1} parent=27 // pred_fallthru
          _
        %s502 = sand.u32 %s89, 1
        %s503 = scalar_lea.sflag [#allocation6], %s502
        %s504 = sand.u32 %s89, 1
        %s505 = smul.addr %s504, 16
        %s506 = scalar_lea.vmem [#allocation9], %s505
        // Predicated region
        $region45: #{run.1} parent=27 // pred_check
          %p507 = pneg %p99
        $region46: #{run.1} parent=27 // pred_check_branch
          %509 = sbr.rel (%p507) target = $region48
        $region47: #{run.1} parent=27 // pred_region
          %511 = vsyncadd %s503, 0
          %s512 = smul.addr %s24, 2
          %s513 = smul.addr %s512, 8
          %s514 = scalar_lea.hbm %s2, %s513
          %s515 = sshll.u32 %s506, 4
          %s516 = int_to_ptr.vmem [resolvable:$true] %s515
          %s517 = sshll.u32 %s514, 4
          %s518 = int_to_ptr.hbm [resolvable:$true] %s517
          %523 = dma.vmem_to_hbm [thread:$0]  %s516, 256, %s518, %s503, 128, 128, 8
        $region48: #{run.1} parent=27 // pred_fallthru
          _
      $region28: #{run.1} parent=5 // pred_fallthru
        _
      %p524 = scmp.le.s32.totalorder 2, %s15
      // Predicated region
      $region49: #{run.1} parent=5 // pred_check
        %p525 = pneg %p524
      $region50: #{run.1} parent=5 // pred_check_branch
        %527 = sbr.rel (%p525) target = $region52
      $region51: #{run.1} parent=5 // pred_region
        %s528 = ssub.s32 %s15, 2
        // Predicated region
        $region53: #{run.1} parent=51 // pred_check
          %p529 = pneg %p105
        $region54: #{run.1} parent=51 // pred_check_branch
          %531 = sbr.rel (%p529) target = $region56
        $region55: #{run.1} parent=51 // pred_region
          %s532 = sand.u32 %s90, 1
          %s533 = scalar_lea.sflag [#allocation6], %s532
          %s534 = sand.u32 %s90, 1
          %s535 = smul.addr %s534, 16
          %s536 = scalar_lea.vmem [#allocation9], %s535
          %538 = dma.done %s533, 256
        $region56: #{run.1} parent=51 // pred_fallthru
          _
      $region52: #{run.1} parent=5 // pred_fallthru
        _
    $region6: #{run.1} parent=1 // loop_footer
      %s19 = sadd.s32 1, %s15
    $region7: #{run.1} parent=1 // loop_footer_branch
      %14 = sbr.rel target = $region3
    $region8: #{run.1} parent=1 // loop_exit
      _
    %539 = vsyncpa [#allocation5], 1
    %s540 = scalar_lea.sflag [#allocation5], 1
    %541 = vsyncpa %s540, 1
    %542 = vsyncpa [#allocation8], 1
    %543 = vsyncpa [#allocation6], 1
    %s544 = scalar_lea.sflag [#allocation6], 1
    %545 = vsyncpa %s544, 1

</llo_original>
